<compile_context>
chip_gen: v7x
topology: tpu7x:2x2x1
jax: 0.10.0
libtpu: 0.0.40
codegen_flags: <defaults>
</compile_context>

<pallas_src>
import functools
import math

import jax
import jax.numpy as jnp
import numpy as np
from jax.experimental import pallas as pl
from jax.experimental.pallas import tpu as pltpu


_VMEM_LIMIT = 48 * 1024 * 1024  # safe on v5e/v6e (128 MiB) and v7x (64 MiB phys)


def _ru(x, m):
    return ((x + m - 1) // m) * m


def _row_tiles(R):
    rt = 512 if R > 512 else _ru(max(R, 1), 8)
    return rt, _ru(R, rt)


# ----------------------------------------------------------------------------
# Tiled MXU matmul + fused epilogue (bias [+ residual]) * scale [+ tanh]
# ----------------------------------------------------------------------------

def _mm_kernel(x_ref, w_ref, b_ref, o_ref, acc_ref, *, act, scale):
    k = pl.program_id(2)

    @pl.when(k == 0)
    def _():
        acc_ref[...] = jnp.zeros_like(acc_ref)

    acc_ref[...] += jnp.dot(x_ref[...], w_ref[...],
                            preferred_element_type=jnp.float32)

    @pl.when(k == pl.num_programs(2) - 1)
    def _():
        r = (acc_ref[...] + b_ref[...]) * scale
        if act == "tanh":
            r = jnp.tanh(r)
        o_ref[...] = r


def _mm_res_kernel(x_ref, w_ref, b_ref, res_ref, o_ref, acc_ref, *, act, scale):
    k = pl.program_id(2)

    @pl.when(k == 0)
    def _():
        acc_ref[...] = jnp.zeros_like(acc_ref)

    acc_ref[...] += jnp.dot(x_ref[...], w_ref[...],
                            preferred_element_type=jnp.float32)

    @pl.when(k == pl.num_programs(2) - 1)
    def _():
        r = (acc_ref[...] + b_ref[...] + res_ref[...]) * scale
        if act == "tanh":
            r = jnp.tanh(r)
        o_ref[...] = r


def matmul_bias(x, w, b, *, res=None, scale=1.0, act=None):
    """y = act((x @ w + b [+ res]) * scale); tiled MXU, bf16 operands, f32 accum."""
    M, K = x.shape
    _, N = w.shape
    tm = 256 if M > 256 else _ru(M, 8)
    tn = 256 if N > 256 else _ru(N, 128)
    tk = 512 if K > 512 else _ru(K, 8)
    Mp, Np, Kp = _ru(M, tm), _ru(N, tn), _ru(K, tk)

    xp = jnp.pad(x.astype(jnp.bfloat16), ((0, Mp - M), (0, Kp - K)))
    wp = jnp.pad(w.astype(jnp.bfloat16), ((0, Kp - K), (0, Np - N)))
    bp = jnp.pad(jnp.reshape(b, (1, N)).astype(jnp.float32),
                 ((0, 0), (0, Np - N)))

    args = [xp, wp, bp]
    in_specs = [
        pl.BlockSpec((tm, tk), lambda i, j, k: (i, k)),
        pl.BlockSpec((tk, tn), lambda i, j, k: (k, j)),
        pl.BlockSpec((1, tn), lambda i, j, k: (0, j)),
    ]
    if res is not None:
        rp = jnp.pad(res.astype(jnp.float32), ((0, Mp - M), (0, Np - N)))
        args.append(rp)
        in_specs.append(pl.BlockSpec((tm, tn), lambda i, j, k: (i, j)))
        kern = functools.partial(_mm_res_kernel, act=act, scale=float(scale))
    else:
        kern = functools.partial(_mm_kernel, act=act, scale=float(scale))

    out = pl.pallas_call(
        kern,
        out_shape=jax.ShapeDtypeStruct((Mp, Np), jnp.float32),
        grid=(Mp // tm, Np // tn, Kp // tk),
        in_specs=in_specs,
        out_specs=pl.BlockSpec((tm, tn), lambda i, j, k: (i, j)),
        scratch_shapes=[pltpu.VMEM((tm, tn), jnp.float32)],
        compiler_params=pltpu.CompilerParams(
            dimension_semantics=("parallel", "parallel", "arbitrary"),
            vmem_limit_bytes=_VMEM_LIMIT),
    )(*args)
    return out[:M, :N]


# ----------------------------------------------------------------------------
# Tiled elementwise kernels
# ----------------------------------------------------------------------------

def _snake_kernel(x_ref, a_ref, o_ref):
    x = x_ref[...]
    a = a_ref[...]
    s = jnp.sin(a * x)
    # 1e-9 guards alpha ~ 0.
    o_ref[...] = x + s * s / (a + 1e-9)


def snake(x, alpha):
    """x + sin(alpha*x)^2 / alpha with per-channel alpha; tiled over rows."""
    B, T, C = x.shape
    R = B * T
    rt, Rp = _row_tiles(R)
    xf = jnp.pad(x.reshape(R, C).astype(jnp.float32), ((0, Rp - R), (0, 0)))
    a = jnp.reshape(alpha, (1, C)).astype(jnp.float32)
    out = pl.pallas_call(
        _snake_kernel,
        out_shape=jax.ShapeDtypeStruct((Rp, C), jnp.float32),
        grid=(Rp // rt,),
        in_specs=[pl.BlockSpec((rt, C), lambda i: (i, 0)),
                  pl.BlockSpec((1, C), lambda i: (0, 0))],
        out_specs=pl.BlockSpec((rt, C), lambda i: (i, 0)),
        compiler_params=pltpu.CompilerParams(
            dimension_semantics=("parallel",), vmem_limit_bytes=_VMEM_LIMIT),
    )(xf, a)
    return out[:R].reshape(B, T, C)


def _add_scale_kernel(x_ref, y_ref, o_ref, *, scale):
    o_ref[...] = (x_ref[...] + y_ref[...]) * scale


def add_scaled(x, y, scale):
    B, T, C = x.shape
    R = B * T
    rt, Rp = _row_tiles(R)
    xf = jnp.pad(x.reshape(R, C).astype(jnp.float32), ((0, Rp - R), (0, 0)))
    yf = jnp.pad(y.reshape(R, C).astype(jnp.float32), ((0, Rp - R), (0, 0)))
    out = pl.pallas_call(
        functools.partial(_add_scale_kernel, scale=float(scale)),
        out_shape=jax.ShapeDtypeStruct((Rp, C), jnp.float32),
        grid=(Rp // rt,),
        in_specs=[pl.BlockSpec((rt, C), lambda i: (i, 0)),
                  pl.BlockSpec((rt, C), lambda i: (i, 0))],
        out_specs=pl.BlockSpec((rt, C), lambda i: (i, 0)),
        compiler_params=pltpu.CompilerParams(
            dimension_semantics=("parallel",), vmem_limit_bytes=_VMEM_LIMIT),
    )(xf, yf)
    return out[:R].reshape(B, T, C)


# ----------------------------------------------------------------------------
# Fused AdaIN1d (+ snake / leaky-relu): two-pass tiled instance-norm
# ----------------------------------------------------------------------------

def _adain_stats_kernel(x_ref, mean_ref, rstd_ref, *, t_true):
    t = pl.program_id(1)

    @pl.when(t == 0)
    def _():
        mean_ref[...] = jnp.zeros_like(mean_ref)
        rstd_ref[...] = jnp.zeros_like(rstd_ref)

    x = x_ref[...]
    mean_ref[...] += jnp.sum(x, axis=1, keepdims=True)
    rstd_ref[...] += jnp.sum(x * x, axis=1, keepdims=True)

    @pl.when(t == pl.num_programs(1) - 1)
    def _():
        inv_t = 1.0 / t_true
        mu = mean_ref[...] * inv_t
        var = rstd_ref[...] * inv_t - mu * mu           # biased var (InstanceNorm)
        mean_ref[...] = mu
        rstd_ref[...] = jax.lax.rsqrt(jnp.maximum(var, 0.0) + 1e-5)


def _adain_affine(x, mu, rs, g, bt):
    return (1.0 + g) * ((x - mu) * rs) + bt


def _adain_snake_kernel(x_ref, mu_ref, rs_ref, g_ref, bt_ref, a_ref, o_ref):
    y = _adain_affine(x_ref[...], mu_ref[...], rs_ref[...], g_ref[...], bt_ref[...])
    a = a_ref[...]
    s = jnp.sin(a * y)
    o_ref[...] = y + s * s / (a + 1e-9)


def _adain_leaky_kernel(x_ref, mu_ref, rs_ref, g_ref, bt_ref, o_ref):
    y = _adain_affine(x_ref[...], mu_ref[...], rs_ref[...], g_ref[...], bt_ref[...])
    o_ref[...] = jnp.where(y >= 0.0, y, 0.2 * y)


def adain_act(x, s, fc, *, act, alpha=None):
    """AdaIN1d: (1+gamma)*InstanceNorm(x)+beta, fused with snake or leaky-relu."""
    B, T, C = x.shape
    h = matmul_bias(s, jnp.transpose(fc["w"]), fc["b"])          # (B, 2C)
    gamma = h[:, :C].reshape(B, 1, C)
    beta = h[:, C:].reshape(B, 1, C)

    tt = 512 if T > 512 else _ru(T, 8)
    Tp = _ru(T, tt)
    nT = Tp // tt
    xp = jnp.pad(x.astype(jnp.float32), ((0, 0), (0, Tp - T), (0, 0)))

    # pass 1: per-(B, C) mean / rstd over time (zero pad rows add nothing to sums)
    mean, rstd = pl.pallas_call(
        functools.partial(_adain_stats_kernel, t_true=float(T)),
        out_shape=(jax.ShapeDtypeStruct((B, 1, C), jnp.float32),
                   jax.ShapeDtypeStruct((B, 1, C), jnp.float32)),
        grid=(B, nT),
        in_specs=[pl.BlockSpec((1, tt, C), lambda b, t: (b, t, 0))],
        out_specs=(pl.BlockSpec((1, 1, C), lambda b, t: (b, 0, 0)),
                   pl.BlockSpec((1, 1, C), lambda b, t: (b, 0, 0))),
        compiler_params=pltpu.CompilerParams(
            dimension_semantics=("parallel", "arbitrary"),
            vmem_limit_bytes=_VMEM_LIMIT),
    )(xp)

    # pass 2: normalize + style affine + activation, tiled over time
    per_b = pl.BlockSpec((1, 1, C), lambda b, t: (b, 0, 0))
    args = [xp, mean, rstd, gamma, beta]
    in_specs = [pl.BlockSpec((1, tt, C), lambda b, t: (b, t, 0)),
                per_b, per_b, per_b, per_b]
    if act == "snake":
        a = jnp.reshape(alpha, (1, 1, C)).astype(jnp.float32)
        args.append(a)
        in_specs.append(pl.BlockSpec((1, 1, C), lambda b, t: (0, 0, 0)))
        kern = _adain_snake_kernel
    else:
        kern = _adain_leaky_kernel

    out = pl.pallas_call(
        kern,
        out_shape=jax.ShapeDtypeStruct((B, Tp, C), jnp.float32),
        grid=(B, nT),
        in_specs=in_specs,
        out_specs=pl.BlockSpec((1, tt, C), lambda b, t: (b, t, 0)),
        compiler_params=pltpu.CompilerParams(
            dimension_semantics=("parallel", "parallel"),
            vmem_limit_bytes=_VMEM_LIMIT),
    )(*args)
    return out[:, :T, :]


# ----------------------------------------------------------------------------
# Convolutions (bf16 im2col glue + tiled matmul with fused epilogue)
# ----------------------------------------------------------------------------

def conv1d(x_btc, weight, bias, *, stride=1, padding=0, dilation=1,
           res=None, out_scale=1.0, act=None):
    """Conv1d (PyTorch weight layout (Cout, Cin, K)); x is (B, T, Cin).
    Fused epilogue: out = act((conv + bias [+ res]) * out_scale)."""
    B, T, Cin = x_btc.shape
    Cout, _, K = weight.shape
    # bf16 im2col: halves the gather HBM traffic; matmul accumulates in f32.
    xb = x_btc.astype(jnp.bfloat16)
    xp = jnp.pad(xb, ((0, 0), (padding, padding), (0, 0)))
    Tp = T + 2 * padding
    span = dilation * (K - 1) + 1
    T_out = (Tp - span) // stride + 1
    # TODO(synk): im2col is still materialized in HBM; folding the K taps into the
    # matmul grid (haloed / Element-indexed x blocks) would cut HBM traffic ~K x.
    cols = [
        xp[:, k * dilation: k * dilation + stride * (T_out - 1) + 1: stride, :]
        for k in range(K)
    ]
    xcol = jnp.stack(cols, axis=2).reshape(B * T_out, K * Cin)
    wflat = jnp.transpose(weight, (2, 1, 0)).reshape(K * Cin, Cout)
    res2 = None if res is None else res.reshape(B * T_out, Cout)
    y = matmul_bias(xcol, wflat, bias, res=res2, scale=out_scale, act=act)
    return y.reshape(B, T_out, Cout)


def conv_transpose1d(x_btc, weight, bias, *, stride, padding, output_padding,
                     res=None, out_scale=1.0):
    """ConvTranspose1d (PyTorch weight layout (Cin, Cout, K)); x is (B, T, Cin).

    Polyphase decomposition (stride s):
      y[n, co] = b[co] + sum_{ci,j} x[q-j, ci] * W[ci, co, j*s + r],
      with m = n + padding, q = m // s, r = m % s, j in [0, ceil(K/s)).
    This is ONE matmul  (B*Q, J*Cin) x (J*Cin, s*Cout)  -> phase-interleave ->
    slice.  No zero-stuffing: ~s x less MXU work / im2col HBM than the naive
    transposed conv.  The residual (x + x_source) is fused into the epilogue by
    laying it out in the same phase-interleaved slab.
    """
    B, T, Cin = x_btc.shape
    _, Cout, K = weight.shape
    s = int(stride)
    p = int(padding)
    L_out = (T - 1) * s - 2 * p + K + int(output_padding)

    if s == 1:
        # Degenerates to an ordinary convolution (flip kernel, full padding).
        pad_l = K - 1 - p
        pad_r = K - 1 - p + int(output_padding)
        xq = jnp.pad(x_btc, ((0, 0), (pad_l, pad_r), (0, 0)))
        w_conv = jnp.transpose(jnp.flip(weight, axis=2), (1, 0, 2))
        return conv1d(xq, w_conv, bias, stride=1, padding=0, dilation=1,
                      res=res, out_scale=out_scale)

    J = -(-K // s)                                   # ceil(K / s)
    Q = -(-(p + L_out) // s)                         # ceil((p + L_out) / s)

    # Gather the J taps: X_cols[b, q, j, ci] = x[b, q - j, ci] (zero outside [0,T)).
    xb = x_btc.astype(jnp.bfloat16)
    xpad = jnp.pad(xb, ((0, 0), (J - 1, max(Q - T, 0)), (0, 0)))
    taps = [xpad[:, (J - 1 - j):(J - 1 - j) + Q, :] for j in range(J)]
    xcol = jnp.stack(taps, axis=2).reshape(B * Q, J * Cin)

    # Polyphase weight: W_poly[(j, ci), (r, co)] = W[ci, co, j*s + r] (0 if >= K).
    wt = jnp.transpose(weight, (2, 0, 1))            # (K, Cin, Cout)
    wt = jnp.pad(wt, ((0, J * s - K), (0, 0), (0, 0)))
    w_poly = jnp.transpose(wt.reshape(J, s, Cin, Cout),
                           (0, 2, 1, 3)).reshape(J * Cin, s * Cout)
    b_poly = jnp.tile(jnp.reshape(bias, (Cout,)), (s,))   # (s*Cout,)

    res2 = None
    if res is not None:
        # Lay the residual out in the same (q, r) phase-interleaved slab.
        res_flat = jnp.pad(res.astype(jnp.float32),
                           ((0, 0), (p, Q * s - p - L_out), (0, 0)))
        res2 = res_flat.reshape(B * Q, s * Cout)

    y = matmul_bias(xcol, w_poly, b_poly, res=res2, scale=out_scale)
    y = y.reshape(B, Q * s, Cout)[:, p:p + L_out, :]
    return y


def _pool_up2_kernel(x_ref, xn_ref, w_ref, b_ref, e_ref, o_ref):
    # polyphase depthwise ConvTranspose1d(k=3, s=2, p=1, op=1):
    #   even outputs = x*wf1 + b ; odd outputs = x*wf0 + x_next*wf2 + b
    x = x_ref[...]
    xn = xn_ref[...]
    wr = w_ref[...]
    b = b_ref[...]
    e_ref[...] = x * wr[1:2, :] + b
    o_ref[...] = x * wr[0:1, :] + xn * wr[2:3, :] + b


def depthwise_conv_transpose1d_x2(x_btc, weight, bias):
    """Grouped ConvTranspose1d(k=3, stride=2, padding=1, output_padding=1)."""
    B, T, C = x_btc.shape
    wf = jnp.transpose(jnp.flip(weight[:, 0, :], axis=1)).astype(jnp.float32)  # (3,C)
    b2 = jnp.reshape(bias, (1, C)).astype(jnp.float32)
    xf = x_btc.astype(jnp.float32)
    xn = jnp.concatenate([xf[:, 1:, :], jnp.zeros((B, 1, C), jnp.float32)], axis=1)
    R = B * T
    rt, Rp = _row_tiles(R)
    xr = jnp.pad(xf.reshape(R, C), ((0, Rp - R), (0, 0)))
    xnr = jnp.pad(xn.reshape(R, C), ((0, Rp - R), (0, 0)))
    even, odd = pl.pallas_call(
        _pool_up2_kernel,
        out_shape=(jax.ShapeDtypeStruct((Rp, C), jnp.float32),) * 2,
        grid=(Rp // rt,),
        in_specs=[pl.BlockSpec((rt, C), lambda i: (i, 0)),
                  pl.BlockSpec((rt, C), lambda i: (i, 0)),
                  pl.BlockSpec((3, C), lambda i: (0, 0)),
                  pl.BlockSpec((1, C), lambda i: (0, 0))],
        out_specs=(pl.BlockSpec((rt, C), lambda i: (i, 0)),) * 2,
        compiler_params=pltpu.CompilerParams(
            dimension_semantics=("parallel",), vmem_limit_bytes=_VMEM_LIMIT),
    )(xr, xnr, wf, b2)
    even = even[:R].reshape(B, T, C)
    odd = odd[:R].reshape(B, T, C)
    return jnp.stack([even, odd], axis=2).reshape(B, 2 * T, C)


def _conv1ch_kernel(s0_ref, s1_ref, s2_ref, wb_ref, o_ref):
    wb = wb_ref[...]
    o_ref[...] = (s0_ref[...] * wb[0, 0] + s1_ref[...] * wb[0, 1]
                  + s2_ref[...] * wb[0, 2] + wb[0, 3])


def conv1d_1ch_k3s2(x_bl, weight, bias):
    """Conv1d(1, 1, k=3, stride=2, padding=1) on (B, L), time kept in the lane dim."""
    B, L = x_bl.shape
    T_out = (L - 1) // 2 + 1
    xp = jnp.pad(x_bl.astype(jnp.float32), ((0, 0), (1, 1)))
    s0 = xp[:, 0:2 * T_out:2]
    s1 = xp[:, 1:2 * T_out:2]
    s2 = xp[:, 2:2 * T_out + 1:2]
    wb = jnp.concatenate([jnp.reshape(weight, (3,)),
                          jnp.reshape(bias, (1,))]).reshape(1, 4).astype(jnp.float32)
    return pl.pallas_call(
        _conv1ch_kernel,
        out_shape=jax.ShapeDtypeStruct((B, T_out), jnp.float32),
    )(s0, s1, s2, wb)


# ----------------------------------------------------------------------------
# Fused SineGen mix + 9->1 linear + tanh (SourceModuleHnNSF)
# ----------------------------------------------------------------------------

def _source_kernel(ph_ref, uv_ref, nz_ref, w_ref, b_ref, o_ref, *, sine_amp):
    sine = jnp.sin(ph_ref[...]) * sine_amp * uv_ref[...] + nz_ref[...]   # (B,9,lt)
    merged = jnp.sum(sine * w_ref[...], axis=1, keepdims=True) + b_ref[...]
    o_ref[...] = jnp.tanh(merged)


def source_module_apply(lin, f0_bl, key):
    """SourceModuleHnNSF: harmonic sine source -> Linear(9->1) -> tanh. f0: (B, L)."""
    sr, harmonic_num = 24000.0, 8
    dim = harmonic_num + 1
    sine_amp, noise_std, voiced_threshold = 0.1, 0.003, 10.0
    B, L = f0_bl.shape
    harmonics = jnp.arange(1, dim + 1, dtype=jnp.float32).reshape(1, dim, 1)
    fn = f0_bl[:, None, :] * harmonics                               # (B, 9, L)
    rad = (fn / sr) % 1.0
    k1, k2 = jax.random.split(key, 2)
    rand_ini = jax.random.uniform(k1, (B, dim), jnp.float32)
    rand_ini = rand_ini.at[:, 0].set(0.0)
    rad = rad.at[:, :, 0].add(rand_ini)
    tmp_over_one = jnp.cumsum(rad, axis=2) % 1.0                     # prefix scan (glue)
    shifted = jnp.concatenate(
        [tmp_over_one[:, :, 1:], jnp.zeros((B, dim, 1), jnp.float32)], axis=2)
    idx = ((shifted - tmp_over_one)[:, :, :-1] < 0).astype(jnp.float32)
    cumsum_shift = jnp.concatenate(
        [jnp.zeros((B, dim, 1), jnp.float32), -idx], axis=2)
    phase = jnp.cumsum(rad + cumsum_shift, axis=2) * (2.0 * np.pi)
    uv = (f0_bl > voiced_threshold).astype(jnp.float32)              # (B, L)
    noise_amp = uv * noise_std + (1.0 - uv) * sine_amp / 3.0
    noise = noise_amp[:, None, :] * jax.random.normal(k2, (B, dim, L), jnp.float32)

    lt = 2048 if L > 2048 else _ru(L, 128)
    Lp = _ru(L, lt)
    pad = ((0, 0), (0, 0), (0, Lp - L))
    w = jnp.reshape(lin["w"], (1, dim, 1)).astype(jnp.float32)
    bb = jnp.reshape(lin["b"], (1, 1, 1)).astype(jnp.float32)
    out = pl.pallas_call(
        functools.partial(_source_kernel, sine_amp=sine_amp),
        out_shape=jax.ShapeDtypeStruct((B, 1, Lp), jnp.float32),
        grid=(Lp // lt,),
        in_specs=[pl.BlockSpec((B, dim, lt), lambda i: (0, 0, i)),
                  pl.BlockSpec((B, 1, lt), lambda i: (0, 0, i)),
                  pl.BlockSpec((B, dim, lt), lambda i: (0, 0, i)),
                  pl.BlockSpec((1, dim, 1), lambda i: (0, 0, 0)),
                  pl.BlockSpec((1, 1, 1), lambda i: (0, 0, 0))],
        out_specs=pl.BlockSpec((B, 1, lt), lambda i: (0, 0, i)),
        compiler_params=pltpu.CompilerParams(
            dimension_semantics=("parallel",), vmem_limit_bytes=_VMEM_LIMIT),
    )(jnp.pad(phase, pad), jnp.pad(uv[:, None, :], pad), jnp.pad(noise, pad), w, bb)
    return jnp.transpose(out[:, :, :L], (0, 2, 1))                   # (B, L, 1)


# ----------------------------------------------------------------------------
# Parameter construction (deterministic synthetic weights)
# ----------------------------------------------------------------------------

class PRNG:
    def __init__(self, key):
        self.key = key

    def next(self):
        self.key, sub = jax.random.split(self.key)
        return sub


def init_conv1d_params(rng, cout, cin, k, bias=True, scale=0.05):
    p = {"w": jax.random.normal(rng.next(), (cout, cin, k), jnp.float32) * scale}
    if bias:
        p["b"] = jax.random.normal(rng.next(), (cout,), jnp.float32) * 0.01
    else:
        p["b"] = jnp.zeros((cout,), jnp.float32)
    return p


def init_linear_params(rng, cout, cin, scale=0.05):
    return {
        "w": jax.random.normal(rng.next(), (cout, cin), jnp.float32) * scale,
        "b": jnp.zeros((cout,), jnp.float32),
    }


def init_adain1d_params(rng, style_dim, C):
    return init_linear_params(rng, 2 * C, style_dim)


def init_adain_resblock1_params(rng, C, k, dilations, style_dim):
    p = {"k": k, "dil": list(dilations)}
    p["convs1"] = [init_conv1d_params(rng, C, C, k) for _ in range(3)]
    p["convs2"] = [init_conv1d_params(rng, C, C, k) for _ in range(3)]
    p["adain1"] = [init_adain1d_params(rng, style_dim, C) for _ in range(3)]
    p["adain2"] = [init_adain1d_params(rng, style_dim, C) for _ in range(3)]
    p["alpha1"] = [jnp.ones((C,), jnp.float32) for _ in range(3)]
    p["alpha2"] = [jnp.ones((C,), jnp.float32) for _ in range(3)]
    return p


# TODO(synk): AdainResBlk1d is not defined in the provided source; the standard
# StyleTTS2 definition (AdaIN -> LeakyReLU(0.2) -> [depthwise ConvTranspose pool]
# -> Conv3 x2, 1x1 learned shortcut, /sqrt(2), nearest-upsample shortcut) is used.
def init_adain_resblk1d_params(rng, dim_in, dim_out, style_dim, upsample=False):
    p = {"upsample": upsample}
    p["norm1"] = init_adain1d_params(rng, style_dim, dim_in)
    p["norm2"] = init_adain1d_params(rng, style_dim, dim_out)
    p["conv1"] = init_conv1d_params(rng, dim_out, dim_in, 3)
    p["conv2"] = init_conv1d_params(rng, dim_out, dim_out, 3)
    p["conv1x1"] = (
        init_conv1d_params(rng, dim_out, dim_in, 1, bias=False)
        if dim_in != dim_out else None
    )
    if upsample:
        p["pool"] = {
            "w": jax.random.normal(rng.next(), (dim_in, 1, 3), jnp.float32) * 0.05,
            "b": jnp.zeros((dim_in,), jnp.float32),
        }
    return p


def init_generator_params(rng, cfg):
    style_dim = cfg["style_dim"]
    rks, rds = cfg["resblock_kernel_sizes"], cfg["resblock_dilation_sizes"]
    urs, uks = cfg["upsample_rates"], cfg["upsample_kernel_sizes"]
    uic = cfg["upsample_initial_channel"]
    p = {"m_source_lin": init_linear_params(rng, 1, 9)}     # harmonic_num=8 -> 9
    p["ups"], p["noise_convs"], p["noise_res"] = [], [], []
    for i, (u, k) in enumerate(zip(urs, uks)):
        cin = uic // (2 ** i)
        cout = uic // (2 ** (i + 1))
        p["ups"].append({
            "w": jax.random.normal(rng.next(), (cin, cout, k), jnp.float32) * 0.05,
            "b": jnp.zeros((cout,), jnp.float32),
            "stride": u, "padding": u // 2 + u % 2, "output_padding": u % 2,
        })
        if i + 1 < len(urs):
            stride_f0 = int(np.prod(urs[i + 1:]))
            nc = init_conv1d_params(rng, cout, 1, 2 * stride_f0)
            nc.update(stride=stride_f0, padding=(stride_f0 + 1) // 2)
            p["noise_convs"].append(nc)
            p["noise_res"].append(
                init_adain_resblock1_params(rng, cout, 7, [1, 3, 5], style_dim))
        else:
            nc = init_conv1d_params(rng, cout, 1, 1)
            nc.update(stride=1, padding=0)
            p["noise_convs"].append(nc)
            p["noise_res"].append(
                init_adain_resblock1_params(rng, cout, 11, [1, 3, 5], style_dim))
    p["resblocks"] = []
    p["alphas"] = [jnp.ones((uic,), jnp.float32)]
    ch = uic
    for i in range(len(urs)):
        ch = uic // (2 ** (i + 1))
        p["alphas"].append(jnp.ones((ch,), jnp.float32))
        for k, d in zip(rks, rds):
            p["resblocks"].append(
                init_adain_resblock1_params(rng, ch, k, d, style_dim))
    p["conv_post"] = init_conv1d_params(rng, 1, ch, 7)
    return p


def init_decoder_params(rng, cfg):
    dim_in, style_dim = cfg["dim_in"], cfg["style_dim"]
    hidden, arc, uic = cfg["hidden"], cfg["asr_res_ch"], cfg["upsample_initial_channel"]
    p = {}
    p["F0_conv"] = init_conv1d_params(rng, 1, 1, 3)
    p["N_conv"] = init_conv1d_params(rng, 1, 1, 3)
    p["encode"] = init_adain_resblk1d_params(rng, dim_in + 4, hidden, style_dim)
    p["decode"] = [
        init_adain_resblk1d_params(rng, hidden + 2 + arc, hidden, style_dim)
        for _ in range(3)
    ]
    p["decode"].append(
        init_adain_resblk1d_params(rng, hidden + 2 + arc, uic, style_dim,
                                   upsample=True))
    p["asr_res"] = init_conv1d_params(rng, arc, dim_in, 1)
    p["generator"] = init_generator_params(rng, cfg)
    return p


# ----------------------------------------------------------------------------
# Module forward passes
# ----------------------------------------------------------------------------

def adain_resblock1_apply(p, x, s):
    """AdaINResBlock1.forward"""
    k = p["k"]
    for i in range(3):
        d = p["dil"][i]
        xt = adain_act(x, s, p["adain1"][i], act="snake", alpha=p["alpha1"][i])
        xt = conv1d(xt, p["convs1"][i]["w"], p["convs1"][i]["b"],
                    padding=d * (k - 1) // 2, dilation=d)
        xt = adain_act(xt, s, p["adain2"][i], act="snake", alpha=p["alpha2"][i])
        # fused: x = conv2(xt) + x  (residual added in the matmul epilogue)
        x = conv1d(xt, p["convs2"][i]["w"], p["convs2"][i]["b"],
                   padding=(k - 1) // 2, dilation=1, res=x)
    return x


def adain_resblk1d_apply(p, x, s):
    """AdainResBlk1d.forward (StyleTTS2 definition, see TODO above)."""
    h = adain_act(x, s, p["norm1"], act="leaky")
    if p["upsample"]:
        h = depthwise_conv_transpose1d_x2(h, p["pool"]["w"], p["pool"]["b"])
    h = conv1d(h, p["conv1"]["w"], p["conv1"]["b"], padding=1)
    h = adain_act(h, s, p["norm2"], act="leaky")
    sc = x
    if p["upsample"]:
        sc = jnp.repeat(sc, 2, axis=1)                    # nearest upsample x2
    if p["conv1x1"] is not None:
        sc = conv1d(sc, p["conv1x1"]["w"], p["conv1x1"]["b"], padding=0)
    # fused: (conv2(h) + bias + shortcut) / sqrt(2)
    return conv1d(h, p["conv2"]["w"], p["conv2"]["b"], padding=1,
                  res=sc, out_scale=1.0 / math.sqrt(2.0))


def generator_apply(p, x, s, f0_curve, key, cfg):
    """Generator.forward; x: (B, T, C) channels-last, f0_curve: (B, Lf0)."""
    urs = cfg["upsample_rates"]
    num_up, num_k = len(urs), len(cfg["resblock_kernel_sizes"])
    total_up = int(np.prod(urs))
    f0_up = jnp.repeat(f0_curve, total_up, axis=1)                # nearest upsample
    har = source_module_apply(p["m_source_lin"], f0_up, key)      # (B, L, 1)
    for i in range(num_up):
        x = snake(x, p["alphas"][i])
        nc = p["noise_convs"][i]
        x_src = conv1d(har, nc["w"], nc["b"], stride=nc["stride"],
                       padding=nc["padding"])
        x_src = adain_resblock1_apply(p["noise_res"][i], x_src, s)
        up = p["ups"][i]
        # fused: x = ups(x) + x_source (residual added in the polyphase matmul epilogue)
        x = conv_transpose1d(x, up["w"], up["b"], stride=up["stride"],
                             padding=up["padding"],
                             output_padding=up["output_padding"], res=x_src)
        acc = None
        for j in range(num_k):
            r = adain_resblock1_apply(p["resblocks"][i * num_k + j], x, s)
            if acc is None:
                acc = r
            else:
                sc = 1.0 / num_k if j == num_k - 1 else 1.0       # xs / num_kernels
                acc = add_scaled(acc, r, sc)
        x = acc
    x = snake(x, p["alphas"][num_up])
    # conv_post (Cout=1): N padded to 128 in the tiled matmul, tanh fused in epilogue
    x = conv1d(x, p["conv_post"]["w"], p["conv_post"]["b"], padding=3, act="tanh")
    return x


def decoder_apply(params, asr, F0_curve, N, s, key, cfg):
    """Decoder.forward (eval mode).
    asr: (B, dim_in, T) NCT; F0_curve, N: (B, 2*T); s: (B, style_dim).
    Returns (B, 1, T * 2 * prod(upsample_rates)) to match PyTorch output layout."""
    asr_tc = jnp.transpose(asr, (0, 2, 1))                                # (B, T, C)
    F0 = conv1d_1ch_k3s2(F0_curve, params["F0_conv"]["w"],
                         params["F0_conv"]["b"])[:, :, None]              # (B, T, 1)
    Nn = conv1d_1ch_k3s2(N, params["N_conv"]["w"],
                         params["N_conv"]["b"])[:, :, None]
    x = jnp.concatenate([asr_tc, F0, Nn], axis=2)                         # dim_in + 2
    # TODO(synk): torchaudio Conformer (1 layer, 2 heads, depthwise k=7) is not
    # defined in the provided source; it is shape-preserving and passed through.
    x = jnp.concatenate([x, F0, Nn], axis=2)                              # dim_in + 4
    x = adain_resblk1d_apply(params["encode"], x, s)
    asr_res = conv1d(asr_tc, params["asr_res"]["w"], params["asr_res"]["b"], padding=0)
    res = True
    for blk in params["decode"]:
        if res:
            x = jnp.concatenate([x, asr_res, F0, Nn], axis=2)
        x = adain_resblk1d_apply(blk, x, s)
        if blk["upsample"]:
            res = False
    x = generator_apply(params["generator"], x, s, F0_curve, key, cfg)    # (B, Ta, 1)
    return jnp.transpose(x, (0, 2, 1))                                    # (B, 1, Ta)


# ----------------------------------------------------------------------------
# Main
# ----------------------------------------------------------------------------

if __name__ == "__main__":
    # Small configuration consistent with the module's structure
    # (original defaults: dim_in=512, hidden=1024, upsample_rates=[10,5,3,2], ...).
    cfg = dict(
        dim_in=64,
        style_dim=64,
        hidden=128,
        asr_res_ch=64,
        resblock_kernel_sizes=[3, 7],
        resblock_dilation_sizes=[[1, 3, 5], [1, 3, 5]],
        upsample_rates=[4, 3],
        upsample_kernel_sizes=[8, 6],
        upsample_initial_channel=64,
    )

    key = jax.random.PRNGKey(0)
    k_params, k_data = jax.random.split(key)
    params = init_decoder_params(PRNG(k_params), cfg)

    B, T_asr = 2, 8
    L = 2 * T_asr                      # F0/N are at twice the asr frame rate
    k1, k2, k3, k4, k5 = jax.random.split(k_data, 5)
    asr = jax.random.normal(k1, (B, cfg["dim_in"], T_asr), jnp.float32)
    F0_curve = jax.random.uniform(k2, (B, L), jnp.float32, 0.0, 300.0)
    N = jax.random.normal(k3, (B, L), jnp.float32) * 0.1
    s = jax.random.normal(k4, (B, cfg["style_dim"]), jnp.float32)

    out = decoder_apply(params, asr, F0_curve, N, s, k5, cfg)
    out = jax.block_until_ready(out)

    expected_T = T_asr * 2 * int(np.prod(cfg["upsample_rates"]))
    assert out.shape == (B, 1, expected_T), out.shape
    assert bool(jnp.all(jnp.isfinite(out)))
    print("KERNEL_OK")
</pallas_src>

<mosaic_0001>
module attributes {stable_mosaic.version = 11 : i64} {
  func.func @_conv1ch_kernel(%arg0: memref<2x8xf32, #tpu.memory_space<vmem>>, %arg1: memref<2x8xf32, #tpu.memory_space<vmem>>, %arg2: memref<2x8xf32, #tpu.memory_space<vmem>>, %arg3: memref<1x4xf32, #tpu.memory_space<vmem>>, %arg4: memref<2x8xf32, #tpu.memory_space<vmem>>) attributes {dimension_semantics = [], scalar_prefetch = 0 : i64, scratch_operands = 0 : i64, tpu.core_type = #tpu.core_type<tc>} {
    %c0 = arith.constant 0 : index
    %c0_0 = arith.constant 0 : index
    %0 = vector.load %arg3[%c0, %c0_0] : memref<1x4xf32, #tpu.memory_space<vmem>>, vector<1x4xf32>
    %c0_1 = arith.constant 0 : index
    %c0_2 = arith.constant 0 : index
    %1 = vector.load %arg0[%c0_1, %c0_2] : memref<2x8xf32, #tpu.memory_space<vmem>>, vector<2x8xf32>
    %2 = vector.extract_strided_slice %0 {offsets = [0, 0], sizes = [1, 1], strides = [1, 1]} : vector<1x4xf32> to vector<1x1xf32>
    %3 = vector.extract %2[0, 0] : f32 from vector<1x1xf32>
    %4 = vector.broadcast %3 : f32 to vector<2x8xf32>
    %5 = arith.mulf %1, %4 : vector<2x8xf32>
    %c0_3 = arith.constant 0 : index
    %c0_4 = arith.constant 0 : index
    %6 = vector.load %arg1[%c0_3, %c0_4] : memref<2x8xf32, #tpu.memory_space<vmem>>, vector<2x8xf32>
    %7 = vector.extract_strided_slice %0 {offsets = [0, 1], sizes = [1, 1], strides = [1, 1]} : vector<1x4xf32> to vector<1x1xf32>
    %8 = vector.extract %7[0, 0] : f32 from vector<1x1xf32>
    %9 = vector.broadcast %8 : f32 to vector<2x8xf32>
    %10 = arith.mulf %6, %9 : vector<2x8xf32>
    %11 = arith.addf %5, %10 : vector<2x8xf32>
    %c0_5 = arith.constant 0 : index
    %c0_6 = arith.constant 0 : index
    %12 = vector.load %arg2[%c0_5, %c0_6] : memref<2x8xf32, #tpu.memory_space<vmem>>, vector<2x8xf32>
    %13 = vector.extract_strided_slice %0 {offsets = [0, 2], sizes = [1, 1], strides = [1, 1]} : vector<1x4xf32> to vector<1x1xf32>
    %14 = vector.extract %13[0, 0] : f32 from vector<1x1xf32>
    %15 = vector.broadcast %14 : f32 to vector<2x8xf32>
    %16 = arith.mulf %12, %15 : vector<2x8xf32>
    %17 = arith.addf %11, %16 : vector<2x8xf32>
    %18 = vector.extract_strided_slice %0 {offsets = [0, 3], sizes = [1, 1], strides = [1, 1]} : vector<1x4xf32> to vector<1x1xf32>
    %19 = vector.extract %18[0, 0] : f32 from vector<1x1xf32>
    %20 = vector.broadcast %19 : f32 to vector<2x8xf32>
    %21 = arith.addf %17, %20 : vector<2x8xf32>
    %c0_7 = arith.constant 0 : index
    %c0_8 = arith.constant 0 : index
    %22 = vector.load %arg4[%c0_7, %c0_8] : memref<2x8xf32, #tpu.memory_space<vmem>>, vector<2x8xf32>
    tpu.vector_store %arg4[%c0_7, %c0_8], %21 {strides = array<i32>} : memref<2x8xf32, #tpu.memory_space<vmem>>, vector<2x8xf32>,
    return
  }
}

</mosaic_0001>

<llo_original>
// kernel: tpu_custom_call.1
$region0: #{tpu_custom_call.1}
  #allocation0 [shape = 'u32[]', space=smem, size = 0x4, offset = 0x4, fixed_abs, tag = 'smem constant byte address 0x4 - core index']
  #allocation1 [shape = 'u32[144,128]{1,0:T(1,128)}', space=vmem, size = 0x12000, scoped, tag = 'internal scratch']
  %s0 = inlined_call_operand.hbm [shape: f32[2,8], index: 0, kind: input, shape index: {}]
  %s1 = inlined_call_operand.vmem [shape: f32[2,8], index: 1, kind: input, shape index: {}]
  %s2 = inlined_call_operand.vmem [shape: f32[2,8], index: 2, kind: input, shape index: {}]
  %s3 = inlined_call_operand.vmem [shape: f32[1,4], index: 3, kind: input, shape index: {}]
  %s4 = inlined_call_operand.hbm [shape: f32[2,8], index: 4, kind: output, shape index: {}]
  %s5 = sld [smem:[#allocation0]]
  $region30: #{tpu_custom_call.1} parent=0
    _
  %s7 = ssub.s32 1, %s5
  %s8 = scalar_select 0, %s7, %s5
  $region1: #{tpu_custom_call.1} parent=0
    #allocation2 [shape = 'u8[1024]{0}', space=vmem, size = 0x400, scoped, tag = 'input window, operand 0, single buffered']
    #allocation3 [shape = 's32[1]{0}', space=sflag, size = 0x4, scoped, tag = 'scoped memory for tpu_custom_call.1']
    #allocation4 [shape = 's32[1]{0}', space=sflag, size = 0x4, scoped, tag = 'scoped memory for tpu_custom_call.1']
    #allocation5 [shape = 'u8[1024]{0}', space=vmem, size = 0x400, scoped, tag = 'output window, operand 0, single buffered']
    %9 = vsyncpa [#allocation3], 0
    %10 = vsyncpa [#allocation4], 0
    // Predicated region
    $region2: #{tpu_custom_call.1} parent=1 // pred_check
      _
    $region3: #{tpu_custom_call.1} parent=1 // pred_check_branch
      %12 = sbr.rel (0) target = $region5
    $region4: #{tpu_custom_call.1} parent=1 // pred_region
      %s14 = ssub.s32 32, 32
      %15 = vsyncadd [#allocation3], %s14
      %s17 = sshll.u32 [#allocation2], 4
      %s18 = int_to_ptr.vmem [resolvable:$true] %s17
      %20 = dma.hbm_to_vmem [thread:$0]  %s0, 32, %s18, [#allocation3]
    $region5: #{tpu_custom_call.1} parent=1 // pred_fallthru
      _
    // Predicated region
    $region6: #{tpu_custom_call.1} parent=1 // pred_check
      _
    $region7: #{tpu_custom_call.1} parent=1 // pred_check_branch
      %22 = sbr.rel (0) target = $region9
    $region8: #{tpu_custom_call.1} parent=1 // pred_region
      _
    $region9: #{tpu_custom_call.1} parent=1 // pred_fallthru
      _
    // Predicated region
    $region10: #{tpu_custom_call.1} parent=1 // pred_check
      _
    $region11: #{tpu_custom_call.1} parent=1 // pred_check_branch
      %24 = sbr.rel (0) target = $region13
    $region12: #{tpu_custom_call.1} parent=1 // pred_region
      _
    $region13: #{tpu_custom_call.1} parent=1 // pred_fallthru
      _
    // Predicated region
    $region14: #{tpu_custom_call.1} parent=1 // pred_check
      _
    $region15: #{tpu_custom_call.1} parent=1 // pred_check_branch
      %26 = sbr.rel (0) target = $region17
    $region16: #{tpu_custom_call.1} parent=1 // pred_region
      _
    $region17: #{tpu_custom_call.1} parent=1 // pred_fallthru
      _
    // Predicated region
    $region18: #{tpu_custom_call.1} parent=1 // pred_check
      _
    $region19: #{tpu_custom_call.1} parent=1 // pred_check_branch
      %28 = sbr.rel (0) target = $region21
    $region20: #{tpu_custom_call.1} parent=1 // pred_region
      %29 = dma.done [#allocation3], 32
    $region21: #{tpu_custom_call.1} parent=1 // pred_fallthru
      _
    %v30 = vld [vmem:[%s3] sm:$0x1]
    %v31 = vld [vmem:[#allocation2] sm:$0x3]
    %s32 = vtos %v30
    %v33 = vstv %s32
    %v34 = vmul.f32 %v31, %v33
    %v35 = vld [vmem:[%s1] sm:$0x3]
    %36 = vrot.lane.b32.xlu0 %v30, 127
    %v37 = vpop.permute.xlu0 %36
    %s38 = vtos %v37
    %v39 = vstv %s38
    %v40 = vmul.f32 %v35, %v39
    %v41 = vadd.f32 %v34, %v40
    %v42 = vld [vmem:[%s2] sm:$0x3]
    %43 = vrot.lane.b32.xlu0 %v30, 126
    %v44 = vpop.permute.xlu0 %43
    %s45 = vtos %v44
    %v46 = vstv %s45
    %v47 = vmul.f32 %v42, %v46
    %v48 = vadd.f32 %v41, %v47
    %49 = vrot.lane.b32.xlu0 %v30, 125
    %v50 = vpop.permute.xlu0 %49
    %s51 = vtos %v50
    %v52 = vstv %s51
    %v53 = vadd.f32 %v48, %v52
    %vm54 = vcmask 58368
    %55 = vst.msk [vmem:[#allocation5] sm:$0x3] %vm54, %v53
    // Predicated region
    $region22: #{tpu_custom_call.1} parent=1 // pred_check
      _
    $region23: #{tpu_custom_call.1} parent=1 // pred_check_branch
      %57 = sbr.rel (0) target = $region25
    $region24: #{tpu_custom_call.1} parent=1 // pred_region
      %s59 = ssub.s32 32, 32
      %60 = vsyncadd [#allocation4], %s59
      %s62 = sshll.u32 [#allocation5], 4
      %s63 = int_to_ptr.vmem [resolvable:$true] %s62
      %65 = dma.vmem_to_hbm [thread:$0]  %s63, 32, %s4, [#allocation4]
    $region25: #{tpu_custom_call.1} parent=1 // pred_fallthru
      _
    // Predicated region
    $region26: #{tpu_custom_call.1} parent=1 // pred_check
      _
    $region27: #{tpu_custom_call.1} parent=1 // pred_check_branch
      %67 = sbr.rel (0) target = $region29
    $region28: #{tpu_custom_call.1} parent=1 // pred_region
      %68 = dma.done [#allocation4], 32
    $region29: #{tpu_custom_call.1} parent=1 // pred_fallthru
      _
    %69 = vsyncpa [#allocation3], 1
    %70 = vsyncpa [#allocation4], 1

</llo_original>
